<compile_context>
chip_gen: v7x
topology: tpu7x:2x2x1
jax: 0.10.0
libtpu: 0.0.40
codegen_flags: <defaults>
</compile_context>

<pallas_src>
import functools

import jax
import jax.numpy as jnp
from jax.experimental import pallas as pl
from jax.experimental.pallas import tpu as pltpu


def gat_kernel(emb_ref, edges_ref, w_ref, a_b_ref, out_ref):
    # emb_ref  : (N, D+1) f32  -- node embeddings with a trailing ones column
    # edges_ref: (2, E) int32  -- torch layout; edge ids on the LANE axis
    # w_ref    : (3D+8, D) f32 -- packed parameter slab (see gat_layer)
    # a_b_ref  : (1, 1) f32 in SMEM -- scalar bias of the attention Linear
    N, Dp1 = emb_ref.shape
    D = Dp1 - 1
    E = edges_ref.shape[1]

    emb_aug = emb_ref[...]                                                 # (N, D+1)
    emb = emb_aug[:, :D]                                                   # (N, D)

    # ---- unpack the parameter slab (static slices, zero runtime cost) ----
    w_wT = w_ref[0:D, :]                                                   # (D, D)
    t_top = w_ref[D:2 * D, :]                                              # (D, D) trans rows acting on emb
    t_bot = w_ref[2 * D:3 * D, :]                                          # (D, D) trans rows acting on agg
    a_rows = w_ref[3 * D:3 * D + 2, :]                                     # (2, D): [a0; a1]
    w_b = w_ref[3 * D + 2:3 * D + 3, :]                                    # (1, D)
    t_b = w_ref[3 * D + 3:3 * D + 4, :]                                    # (1, D)
    ln_g = w_ref[3 * D + 4:3 * D + 5, :]                                   # (1, D)
    ln_b = w_ref[3 * D + 5:3 * D + 6, :]                                   # (1, D)

    # self.w(emb): Linear D -> D (only feeds the attention logits).
    w_emb = jnp.dot(emb, w_wT, preferred_element_type=jnp.float32) + w_b   # (N, D)

    # Both score halves in ONE matmul (A @ Bᵀ form): s[:,0]=w_emb@a0, s[:,1]=w_emb@a1.
    s = jax.lax.dot_general(w_emb, a_rows, (((1,), (1,)), ((), ())),
                            preferred_element_type=jnp.float32)            # (N, 2)

    # Dense logit matrix L[r,c] = s0[r] + s1[c] + a_b via a rank-2 MXU outer-sum:
    #   u = [s0 + a_b, 1], v = [1, s1], L = u @ vᵀ  (lane-dense, no transposes).
    a_b = a_b_ref[0, 0]                                                    # scalar (SMEM)
    col2 = jax.lax.broadcasted_iota(jnp.int32, (N, 2), 1)
    u = jnp.where(col2 == 0, s + a_b, 1.0)                                 # (N, 2)
    v = jnp.where(col2 == 0, 1.0, s)                                       # (N, 2)
    logits = jax.lax.dot_general(u, v, (((1,), (1,)), ((), ())),
                                 preferred_element_type=jnp.float32)       # (N, N)

    lrelu = jnp.where(logits > 0, logits, 0.2 * logits)                    # LeakyReLU(0.2)
    p = jnp.exp(lrelu)                                                     # f32 (no max-sub, as in torch)

    # counts[r,c] = #edges (r -> c): bf16 one-hots (exact) contracted over E on MXU.
    edges = edges_ref[...]                                                 # (2, E) int32
    row_iota = jax.lax.broadcasted_iota(jnp.int32, (N, E), 0)
    oh0t = (edges[0:1, :] == row_iota).astype(jnp.bfloat16)                # (N, E)
    oh1t = (edges[1:2, :] == row_iota).astype(jnp.bfloat16)                # (N, E)
    counts = jax.lax.dot_general(oh0t, oh1t, (((1,), (1,)), ((), ())),
                                 preferred_element_type=jnp.float32)       # (N, N) f32

    # Dense sparse-attention matrix (duplicate edges sum, as in torch). Masking with
    # `where` keeps non-edge pairs at exactly 0 even if their exp() overflowed.
    A = jnp.where(counts > 0.0, counts * p, 0.0)                           # (N, N) f32

    # Aggregation and row-sum from ONE matmul: A @ [emb | 1].
    agg_aug = jnp.dot(A, emb_aug, preferred_element_type=jnp.float32)      # (N, D+1)
    attn_sum = agg_aug[:, D:]                                              # (N, 1)
    agg = agg_aug[:, :D] / (attn_sum + 1e-20)                              # exact divide

    # self.trans(cat([emb, agg], -1)): split 2D->D matmul (no in-kernel concat).
    h = (jnp.dot(emb, t_top, preferred_element_type=jnp.float32)
         + jnp.dot(agg, t_bot, preferred_element_type=jnp.float32)
         + t_b)                                                            # (N, D)

    # LayerNorm over the feature dim (eps = 1e-5, torch default).
    mean = jnp.mean(h, axis=-1, keepdims=True)
    var = jnp.mean((h - mean) ** 2, axis=-1, keepdims=True)
    h_norm = (h - mean) * jax.lax.rsqrt(var + 1e-5)
    out_ref[...] = h_norm * ln_g + ln_b


def gat_layer(emb, edges, params):
    N, D = emb.shape
    # --- wrapper-side layout plumbing (parameters are layer constants) ---
    # One padded parameter slab -> a single VMEM input instead of 8 tiny DMAs.
    a_rows = params["a_wT"].reshape(2, D)                   # [a0; a1]
    slab = jnp.concatenate(
        [params["w_wT"],                                    # rows [0, D)
         params["t_wT"],                                    # rows [D, 3D)
         a_rows,                                            # rows [3D, 3D+2)
         params["w_b"], params["t_b"],
         params["ln_g"], params["ln_b"],                    # rows [3D+2, 3D+6)
         jnp.zeros((2, D), jnp.float32)],                   # pad to an 8-row multiple
        axis=0)                                             # (3D+8, D)
    # Ones column appended so the attention row-sums fall out of A @ [emb | 1].
    emb_aug = jnp.concatenate([emb, jnp.ones((N, 1), emb.dtype)], axis=1)

    vmem = functools.partial(pl.BlockSpec, memory_space=pltpu.MemorySpace.VMEM)
    smem = functools.partial(pl.BlockSpec, memory_space=pltpu.MemorySpace.SMEM)
    return pl.pallas_call(
        gat_kernel,
        out_shape=jax.ShapeDtypeStruct((N, D), jnp.float32),
        in_specs=[vmem(), vmem(), vmem(), smem()],
        out_specs=vmem(),
    )(emb_aug, edges, slab, params["a_b"])


def gat_ref(emb, edges, p):
    """Pure-JAX reference matching the PyTorch forward semantics (edges: (2, E))."""
    N, D = emb.shape
    w_emb = emb @ p["w_wT"] + p["w_b"]
    h0 = w_emb[edges[0]]
    h1 = w_emb[edges[1]]
    logits = (jnp.concatenate([h0, h1], -1) @ p["a_wT"] + p["a_b"])[:, 0]
    attn = jnp.exp(jnp.where(logits > 0, logits, 0.2 * logits))
    A = jnp.zeros((N, N), jnp.float32).at[edges[0], edges[1]].add(attn)
    attn_sum = A.sum(1, keepdims=True)
    agg = (A @ emb) / (attn_sum + 1e-20)
    h = jnp.concatenate([emb, agg], -1) @ p["t_wT"] + p["t_b"]
    mean = h.mean(-1, keepdims=True)
    var = ((h - mean) ** 2).mean(-1, keepdims=True)
    return (h - mean) * jax.lax.rsqrt(var + 1e-5) * p["ln_g"] + p["ln_b"]


def init_params(key, embed_dim):
    D = embed_dim
    std = 1.0 / (D ** 0.5)
    ks = jax.random.split(key, 6)
    return {
        # self.w: uniform(-std, std), bias 0 (per reset_parameters)
        "w_wT": jax.random.uniform(ks[0], (D, D), jnp.float32, -std, std),
        "w_b": jnp.zeros((1, D), jnp.float32),
        # self.a: Linear(2D -> 1)
        "a_wT": jax.random.uniform(ks[1], (2 * D, 1), jnp.float32, -std, std),
        "a_b": jax.random.uniform(ks[2], (1, 1), jnp.float32, -std, std),
        # self.trans: Linear(2D -> D)
        "t_wT": jax.random.uniform(ks[3], (2 * D, D), jnp.float32, -std, std),
        "t_b": jax.random.uniform(ks[4], (1, D), jnp.float32, -std, std),
        # LayerNorm affine params (torch default init: gamma=1, beta=0)
        "ln_g": jnp.ones((1, D), jnp.float32),
        "ln_b": jnp.zeros((1, D), jnp.float32),
    }


if __name__ == "__main__":
    N, D, E = 16, 32, 64  # entity_size, embed_dim, edge_size

    key = jax.random.PRNGKey(0)
    k_emb, k_edge, k_par = jax.random.split(key, 3)

    emb = jax.random.normal(k_emb, (N, D), jnp.float32)
    edges = jax.random.randint(k_edge, (2, E), 0, N, dtype=jnp.int32)  # torch layout (2, E)
    params = init_params(k_par, D)

    out = gat_layer(emb, edges, params)
    out = jax.block_until_ready(out)

    ref = gat_ref(emb, edges, params)
    assert out.shape == (N, D)
    assert jnp.allclose(out, ref, atol=1e-3, rtol=1e-3), "kernel mismatch vs reference"

    print("KERNEL_OK")
</pallas_src>

<mosaic_0001>
module attributes {stable_mosaic.version = 11 : i64} {
  func.func @gat_kernel(%arg0: memref<16x33xf32, #tpu.memory_space<vmem>>, %arg1: memref<2x64xi32, #tpu.memory_space<vmem>>, %arg2: memref<104x32xf32, #tpu.memory_space<vmem>>, %arg3: memref<1x1xf32, #tpu.memory_space<smem>>, %arg4: memref<16x32xf32, #tpu.memory_space<vmem>>) attributes {dimension_semantics = [], scalar_prefetch = 0 : i64, scratch_operands = 0 : i64, tpu.core_type = #tpu.core_type<tc>} {
    %c0 = arith.constant 0 : index
    %c0_0 = arith.constant 0 : index
    %0 = vector.load %arg0[%c0, %c0_0] : memref<16x33xf32, #tpu.memory_space<vmem>>, vector<16x33xf32>
    %1 = vector.extract_strided_slice %0 {offsets = [0, 0], sizes = [16, 32], strides = [1, 1]} : vector<16x33xf32> to vector<16x32xf32>
    %c0_1 = arith.constant 0 : index
    %c0_2 = arith.constant 0 : index
    %2 = vector.load %arg2[%c0_1, %c0_2] : memref<104x32xf32, #tpu.memory_space<vmem>>, vector<32x32xf32>
    %c32 = arith.constant 32 : index
    %c0_3 = arith.constant 0 : index
    %3 = vector.load %arg2[%c32, %c0_3] : memref<104x32xf32, #tpu.memory_space<vmem>>, vector<32x32xf32>
    %c64 = arith.constant 64 : index
    %c0_4 = arith.constant 0 : index
    %4 = vector.load %arg2[%c64, %c0_4] : memref<104x32xf32, #tpu.memory_space<vmem>>, vector<32x32xf32>
    %c96 = arith.constant 96 : index
    %c0_5 = arith.constant 0 : index
    %5 = vector.load %arg2[%c96, %c0_5] : memref<104x32xf32, #tpu.memory_space<vmem>>, vector<2x32xf32>
    %c98 = arith.constant 98 : index
    %c0_6 = arith.constant 0 : index
    %6 = vector.load %arg2[%c98, %c0_6] : memref<104x32xf32, #tpu.memory_space<vmem>>, vector<1x32xf32>
    %c99 = arith.constant 99 : index
    %c0_7 = arith.constant 0 : index
    %7 = vector.load %arg2[%c99, %c0_7] : memref<104x32xf32, #tpu.memory_space<vmem>>, vector<1x32xf32>
    %c100 = arith.constant 100 : index
    %c0_8 = arith.constant 0 : index
    %8 = vector.load %arg2[%c100, %c0_8] : memref<104x32xf32, #tpu.memory_space<vmem>>, vector<1x32xf32>
    %c101 = arith.constant 101 : index
    %c0_9 = arith.constant 0 : index
    %9 = vector.load %arg2[%c101, %c0_9] : memref<104x32xf32, #tpu.memory_space<vmem>>, vector<1x32xf32>
    %cst = arith.constant dense<0.000000e+00> : vector<16x32xf32>
    %10 = tpu.matmul %1, %2, %cst {dimension_numbers = #tpu.dot_dimension_numbers<[1], [0], [0], [1], [0, 0, 1, 1], [], []>} : vector<16x32xf32>, vector<32x32xf32>, vector<16x32xf32> -> vector<16x32xf32>
    %11 = vector.broadcast %6 : vector<1x32xf32> to vector<16x32xf32>
    %12 = arith.addf %10, %11 : vector<16x32xf32>
    %cst_10 = arith.constant dense<0.000000e+00> : vector<16x2xf32>
    %13 = tpu.matmul %12, %5, %cst_10 {dimension_numbers = #tpu.dot_dimension_numbers<[1], [1], [0], [0], [0, 0, 1, 0], [], []>} : vector<16x32xf32>, vector<2x32xf32>, vector<16x2xf32> -> vector<16x2xf32>
    %c0_11 = arith.constant 0 : index
    %c0_12 = arith.constant 0 : index
    %14 = memref.load %arg3[%c0_11, %c0_12] : memref<1x1xf32, #tpu.memory_space<smem>>
    %15 = tpu.iota {dimensions = array<i32: 1>} : vector<16x2xi32>
    %c0_i32 = arith.constant 0 : i32
    %16 = vector.broadcast %c0_i32 : i32 to vector<16x2xi32>
    %17 = arith.cmpi eq, %15, %16 : vector<16x2xi32>
    %18 = vector.broadcast %14 : f32 to vector<16x2xf32>
    %19 = arith.addf %13, %18 : vector<16x2xf32>
    %cst_13 = arith.constant 1.000000e+00 : f32
    %20 = vector.broadcast %cst_13 : f32 to vector<16x2xf32>
    %21 = arith.select %17, %19, %20 : vector<16x2xi1>, vector<16x2xf32>
    %c0_i32_14 = arith.constant 0 : i32
    %22 = vector.broadcast %c0_i32_14 : i32 to vector<16x2xi32>
    %23 = arith.cmpi eq, %15, %22 : vector<16x2xi32>
    %cst_15 = arith.constant 1.000000e+00 : f32
    %24 = vector.broadcast %cst_15 : f32 to vector<16x2xf32>
    %25 = arith.select %23, %24, %13 : vector<16x2xi1>, vector<16x2xf32>
    %cst_16 = arith.constant dense<0.000000e+00> : vector<16x16xf32>
    %26 = tpu.matmul %21, %25, %cst_16 {dimension_numbers = #tpu.dot_dimension_numbers<[1], [1], [0], [0], [0, 0, 1, 0], [], []>} : vector<16x2xf32>, vector<16x2xf32>, vector<16x16xf32> -> vector<16x16xf32>
    %cst_17 = arith.constant 0.000000e+00 : f32
    %27 = vector.broadcast %cst_17 : f32 to vector<16x16xf32>
    %28 = arith.cmpf ogt, %26, %27 : vector<16x16xf32>
    %cst_18 = arith.constant 2.000000e-01 : f32
    %29 = vector.broadcast %cst_18 : f32 to vector<16x16xf32>
    %30 = arith.mulf %29, %26 : vector<16x16xf32>
    %31 = arith.select %28, %26, %30 : vector<16x16xi1>, vector<16x16xf32>
    %32 = math.exp %31 : vector<16x16xf32>
    %c0_19 = arith.constant 0 : index
    %c0_20 = arith.constant 0 : index
    %33 = vector.load %arg1[%c0_19, %c0_20] : memref<2x64xi32, #tpu.memory_space<vmem>>, vector<2x64xi32>
    %34 = tpu.iota {dimensions = array<i32: 0>} : vector<16x64xi32>
    %35 = vector.extract_strided_slice %33 {offsets = [0, 0], sizes = [1, 64], strides = [1, 1]} : vector<2x64xi32> to vector<1x64xi32>
    %36 = vector.broadcast %35 : vector<1x64xi32> to vector<16x64xi32>
    %37 = arith.cmpi eq, %36, %34 : vector<16x64xi32>
    %38 = arith.extui %37 : vector<16x64xi1> to vector<16x64xi32>
    %39 = arith.sitofp %38 : vector<16x64xi32> to vector<16x64xf32>
    %40 = arith.truncf %39 : vector<16x64xf32> to vector<16x64xbf16>
    %41 = vector.extract_strided_slice %33 {offsets = [1, 0], sizes = [1, 64], strides = [1, 1]} : vector<2x64xi32> to vector<1x64xi32>
    %42 = vector.broadcast %41 : vector<1x64xi32> to vector<16x64xi32>
    %43 = arith.cmpi eq, %42, %34 : vector<16x64xi32>
    %44 = arith.extui %43 : vector<16x64xi1> to vector<16x64xi32>
    %45 = arith.sitofp %44 : vector<16x64xi32> to vector<16x64xf32>
    %46 = arith.truncf %45 : vector<16x64xf32> to vector<16x64xbf16>
    %cst_21 = arith.constant dense<0.000000e+00> : vector<16x16xf32>
    %47 = tpu.matmul %40, %46, %cst_21 {dimension_numbers = #tpu.dot_dimension_numbers<[1], [1], [0], [0], [0, 0, 1, 0], [], []>} : vector<16x64xbf16>, vector<16x64xbf16>, vector<16x16xf32> -> vector<16x16xf32>
    %cst_22 = arith.constant 0.000000e+00 : f32
    %48 = vector.broadcast %cst_22 : f32 to vector<16x16xf32>
    %49 = arith.cmpf ogt, %47, %48 : vector<16x16xf32>
    %50 = arith.mulf %47, %32 : vector<16x16xf32>
    %cst_23 = arith.constant 0.000000e+00 : f32
    %51 = vector.broadcast %cst_23 : f32 to vector<16x16xf32>
    %52 = arith.select %49, %50, %51 : vector<16x16xi1>, vector<16x16xf32>
    %cst_24 = arith.constant dense<0.000000e+00> : vector<16x33xf32>
    %53 = tpu.matmul %52, %0, %cst_24 {dimension_numbers = #tpu.dot_dimension_numbers<[1], [0], [0], [1], [0, 0, 1, 1], [], []>} : vector<16x16xf32>, vector<16x33xf32>, vector<16x33xf32> -> vector<16x33xf32>
    %54 = vector.extract_strided_slice %53 {offsets = [0, 32], sizes = [16, 1], strides = [1, 1]} : vector<16x33xf32> to vector<16x1xf32>
    %55 = vector.extract_strided_slice %53 {offsets = [0, 0], sizes = [16, 32], strides = [1, 1]} : vector<16x33xf32> to vector<16x32xf32>
    %cst_25 = arith.constant 9.99999968E-21 : f32
    %56 = vector.broadcast %cst_25 : f32 to vector<16x1xf32>
    %57 = arith.addf %54, %56 : vector<16x1xf32>
    %58 = vector.broadcast %57 : vector<16x1xf32> to vector<16x32xf32>
    %59 = arith.divf %55, %58 : vector<16x32xf32>
    %cst_26 = arith.constant dense<0.000000e+00> : vector<16x32xf32>
    %60 = tpu.matmul %1, %3, %cst_26 {dimension_numbers = #tpu.dot_dimension_numbers<[1], [0], [0], [1], [0, 0, 1, 1], [], []>} : vector<16x32xf32>, vector<32x32xf32>, vector<16x32xf32> -> vector<16x32xf32>
    %cst_27 = arith.constant dense<0.000000e+00> : vector<16x32xf32>
    %61 = tpu.matmul %59, %4, %cst_27 {dimension_numbers = #tpu.dot_dimension_numbers<[1], [0], [0], [1], [0, 0, 1, 1], [], []>} : vector<16x32xf32>, vector<32x32xf32>, vector<16x32xf32> -> vector<16x32xf32>
    %62 = arith.addf %60, %61 : vector<16x32xf32>
    %63 = vector.broadcast %7 : vector<1x32xf32> to vector<16x32xf32>
    %64 = arith.addf %62, %63 : vector<16x32xf32>
    %cst_28 = arith.constant dense<0.000000e+00> : vector<16xf32>
    %65 = vector.multi_reduction <add>, %64, %cst_28 [1] : vector<16x32xf32> to vector<16xf32>
    %66 = vector.shape_cast %65 : vector<16xf32> to vector<16x1xf32>
    %cst_29 = arith.constant 3.200000e+01 : f32
    %67 = vector.broadcast %cst_29 : f32 to vector<16x1xf32>
    %68 = arith.divf %66, %67 : vector<16x1xf32>
    %69 = vector.broadcast %68 : vector<16x1xf32> to vector<16x32xf32>
    %70 = arith.subf %64, %69 : vector<16x32xf32>
    %71 = arith.mulf %70, %70 : vector<16x32xf32>
    %cst_30 = arith.constant dense<0.000000e+00> : vector<16xf32>
    %72 = vector.multi_reduction <add>, %71, %cst_30 [1] : vector<16x32xf32> to vector<16xf32>
    %73 = vector.shape_cast %72 : vector<16xf32> to vector<16x1xf32>
    %cst_31 = arith.constant 3.200000e+01 : f32
    %74 = vector.broadcast %cst_31 : f32 to vector<16x1xf32>
    %75 = arith.divf %73, %74 : vector<16x1xf32>
    %76 = vector.broadcast %68 : vector<16x1xf32> to vector<16x32xf32>
    %77 = arith.subf %64, %76 : vector<16x32xf32>
    %cst_32 = arith.constant 9.99999974E-6 : f32
    %78 = vector.broadcast %cst_32 : f32 to vector<16x1xf32>
    %79 = arith.addf %75, %78 : vector<16x1xf32>
    %80 = math.rsqrt %79 : vector<16x1xf32>
    %81 = vector.broadcast %80 : vector<16x1xf32> to vector<16x32xf32>
    %82 = arith.mulf %77, %81 : vector<16x32xf32>
    %83 = vector.broadcast %8 : vector<1x32xf32> to vector<16x32xf32>
    %84 = arith.mulf %82, %83 : vector<16x32xf32>
    %85 = vector.broadcast %9 : vector<1x32xf32> to vector<16x32xf32>
    %86 = arith.addf %84, %85 : vector<16x32xf32>
    %c0_33 = arith.constant 0 : index
    %c0_34 = arith.constant 0 : index
    %87 = vector.load %arg4[%c0_33, %c0_34] : memref<16x32xf32, #tpu.memory_space<vmem>>, vector<16x32xf32>
    tpu.vector_store %arg4[%c0_33, %c0_34], %86 {strides = array<i32>} : memref<16x32xf32, #tpu.memory_space<vmem>>, vector<16x32xf32>,
    return
  }
}

</mosaic_0001>

<llo_original>
// kernel: tpu_custom_call.1
$region0: #{tpu_custom_call.1}
  #allocation0 [shape = 'u32[]', space=smem, size = 0x4, offset = 0x4, fixed_abs, tag = 'smem constant byte address 0x4 - core index']
  #allocation1 [shape = 'u32[144,128]{1,0:T(1,128)}', space=vmem, size = 0x12000, scoped, tag = 'internal scratch']
  #allocation2 [shape = 'f32[1,1]{1,0:T(1,128)S(6)}', space=smem, size = 0x200, scoped, tag = 'scoped memory for tpu_custom_call.1']
  %s0 = inlined_call_operand.vmem [shape: f32[16,33], index: 0, kind: input, shape index: {}]
  %s1 = inlined_call_operand.vmem [shape: s32[2,64], index: 1, kind: input, shape index: {}]
  %s2 = inlined_call_operand.vmem [shape: f32[104,32], index: 2, kind: input, shape index: {}]
  %s3 = inlined_call_operand.<no memory space> [shape: f32[1,1], index: 3, kind: input, shape index: {}]
  %s4 = inlined_call_operand.hbm [shape: f32[16,32], index: 4, kind: output, shape index: {}]
  %s5 = sld [smem:[#allocation0]]
  $region26: #{tpu_custom_call.1} parent=0
    _
  %s7 = ssub.s32 1, %s5
  %s8 = scalar_select 0, %s7, %s5
  %9 = sst [smem:[#allocation2]] %s3
  $region1: #{tpu_custom_call.1} parent=0
    #allocation3 [shape = 'u8[8192]{0}', space=vmem, size = 0x2000, scoped, tag = 'output window, operand 0, single buffered']
    #allocation4 [shape = 's32[1]{0}', space=sflag, size = 0x4, scoped, tag = 'scoped memory for tpu_custom_call.1']
    %10 = vsyncpa [#allocation4], 0
    // Predicated region
    $region2: #{tpu_custom_call.1} parent=1 // pred_check
      _
    $region3: #{tpu_custom_call.1} parent=1 // pred_check_branch
      %12 = sbr.rel (0) target = $region5
    $region4: #{tpu_custom_call.1} parent=1 // pred_region
      _
    $region5: #{tpu_custom_call.1} parent=1 // pred_fallthru
      _
    // Predicated region
    $region6: #{tpu_custom_call.1} parent=1 // pred_check
      _
    $region7: #{tpu_custom_call.1} parent=1 // pred_check_branch
      %14 = sbr.rel (0) target = $region9
    $region8: #{tpu_custom_call.1} parent=1 // pred_region
      _
    $region9: #{tpu_custom_call.1} parent=1 // pred_fallthru
      _
    // Predicated region
    $region10: #{tpu_custom_call.1} parent=1 // pred_check
      _
    $region11: #{tpu_custom_call.1} parent=1 // pred_check_branch
      %16 = sbr.rel (0) target = $region13
    $region12: #{tpu_custom_call.1} parent=1 // pred_region
      _
    $region13: #{tpu_custom_call.1} parent=1 // pred_fallthru
      _
    // Predicated region
    $region14: #{tpu_custom_call.1} parent=1 // pred_check
      _
    $region15: #{tpu_custom_call.1} parent=1 // pred_check_branch
      %18 = sbr.rel (0) target = $region17
    $region16: #{tpu_custom_call.1} parent=1 // pred_region
      _
    $region17: #{tpu_custom_call.1} parent=1 // pred_fallthru
      _
    %v20 = vld [vmem:[%s0] sm:$0xff]
    %v21 = vld [vmem:[%s0 + $0x8] sm:$0xff]
    %v22 = vld [vmem:[%s2] sm:$0xff]
    %v23 = vld [vmem:[%s2 + $0x8] sm:$0xff]
    %v24 = vld [vmem:[%s2 + $0x10] sm:$0xff]
    %v25 = vld [vmem:[%s2 + $0x18] sm:$0xff]
    %v26 = vld [vmem:[%s2 + $0x20] sm:$0xff]
    %v27 = vld [vmem:[%s2 + $0x28] sm:$0xff]
    %v28 = vld [vmem:[%s2 + $0x30] sm:$0xff]
    %v29 = vld [vmem:[%s2 + $0x38] sm:$0xff]
    %v30 = vld [vmem:[%s2 + $0x40] sm:$0xff]
    %v31 = vld [vmem:[%s2 + $0x48] sm:$0xff]
    %v32 = vld [vmem:[%s2 + $0x50] sm:$0xff]
    %v33 = vld [vmem:[%s2 + $0x58] sm:$0xff]
    %v34 = vld [vmem:[%s2 + $0x60] sm:$0x3]
    %v35 = vld [vmem:[%s2 + $0x62] sm:$0x1]
    %v36 = vld [vmem:[%s2 + $0x63] sm:$0x1]
    %v37 = vld [vmem:[%s2 + $0x64] sm:$0x1]
    %v38 = vld [vmem:[%s2 + $0x65] sm:$0x1]
    %v39 = vlaneseq
    %v40 = vshrl.u32 %v39, 7
    %v41 = vsub.s32 0, %v40
    %v42 = vrot.slane %v35, %v41
    %vm43 = vcmask 261120
    %v45 = vsel %vm43, %v20, 0
    %v48 = vsel %vm43, %v21, 0
    %50 = vmatprep.subr.mxu0 0.0
    %51 = vmatpush1.msra.mxu0 %v22
    %52 = vmatprep.subr.mxu0 0.0
    %53 = vmatpush1.msra.mxu0 %v23
    %54 = vmatprep.subr.mxu0 0.0
    %55 = vmatpush1.msra.mxu0 %v24
    %56 = vmatprep.subr.mxu0 0.0
    %57 = vmatpush1.msra.mxu0 %v25
    %58 = vmatprep.subr.mxu0 0.0
    %59 = vmatpush1.msra.mxu0 0.0
    %60 = vmatprep.subr.mxu0 0.0
    %61 = vmatpush1.msra.mxu0 0.0
    %62 = vmatprep.subr.mxu0 0.0
    %63 = vmatpush1.msra.mxu0 0.0
    %64 = vmatprep.subr.mxu0 0.0
    %65 = vmatpush1.msra.mxu0 0.0
    %66 = vmatprep.subr.mxu0 0.0
    %67 = vmatpush1.msra.mxu0 0.0
    %68 = vmatprep.subr.mxu0 0.0
    %69 = vmatpush1.msra.mxu0 0.0
    %70 = vmatprep.subr.mxu0 0.0
    %71 = vmatpush1.msra.mxu0 0.0
    %72 = vmatprep.subr.mxu0 0.0
    %73 = vmatpush1.msra.mxu0 0.0
    %74 = vmatprep.subr.mxu0 0.0
    %75 = vmatpush1.msra.mxu0 0.0
    %76 = vmatprep.subr.mxu0 0.0
    %77 = vmatpush1.msra.mxu0 0.0
    %78 = vmatprep.subr.mxu0 0.0
    %79 = vmatpush1.msra.mxu0 0.0
    %80 = vmatprep.subr.mxu0 0.0
    %81 = vmatpush1.msra.mxu0 0.0
    %82 = vmatprep.subr.mxu0 0.0
    %83 = vmatpush1.msra.mxu0 0.0
    %84 = vmatprep.subr.mxu0 0.0
    %85 = vmatpush1.msra.mxu0 0.0
    %86 = vmatprep.subr.mxu0 0.0
    %87 = vmatpush1.msra.mxu0 0.0
    %88 = vmatprep.subr.mxu0 0.0
    %89 = vmatpush1.msra.mxu0 0.0
    %90 = vmatprep.subr.mxu0 0.0
    %91 = vmatpush1.msra.mxu0 0.0
    %92 = vmatprep.subr.mxu0 0.0
    %93 = vmatpush1.msra.mxu0 0.0
    %94 = vmatprep.subr.mxu0 0.0
    %95 = vmatpush1.msra.mxu0 0.0
    %96 = vmatprep.subr.mxu0 0.0
    %97 = vmatpush1.msra.mxu0 0.0
    %98 = vmatprep.subr.mxu0 0.0
    %99 = vmatpush1.msra.mxu0 0.0
    %100 = vmatprep.subr.mxu0 0.0
    %101 = vmatpush1.msra.mxu0 0.0
    %102 = vmatprep.subr.mxu0 0.0
    %103 = vmatpush1.msra.mxu0 0.0
    %104 = vmatprep.subr.mxu0 0.0
    %105 = vmatpush1.msra.mxu0 0.0
    %106 = vmatprep.subr.mxu0 0.0
    %107 = vmatpush1.msra.mxu0 0.0
    %108 = vmatprep.subr.mxu0 0.0
    %109 = vmatpush1.msra.mxu0 0.0
    %110 = vmatprep.subr.mxu0 0.0
    %111 = vmatpush1.msra.mxu0 0.0
    %112 = vmatprep.subr.mxu0 0.0
    %113 = vmatpush1.msra.mxu0 0.0
    %114 = vmatprep.mubr.f32.mxu0 0.0
    %115 = vmatmul.mubr.f32.gmra.mrb[0].mxu0 %v45
    %v116 = vpop.f32.mrb[0].mxu0
    %v117 = vadd.f32 %v42, %v116
    %v118 = vpop.f32.mrb[0].mxu0
    %119 = vmatprep.mubr.f32.mxu0 0.0
    %120 = vmatmul.mubr.f32.gmra.mrb[0].mxu0 %v48
    %v121 = vpop.f32.mrb[0].mxu0
    %v122 = vadd.f32 %v42, %v121
    %v123 = vpop.f32.mrb[0].mxu0
    %124 = vdwg.mxu0
    %v126 = vsel %vm43, %v117, 0
    %v129 = vsel %vm43, %v122, 0
    %v132 = vsel %vm43, %v34, 0
    %134 = vmatprep.subr.mxu0 0.0
    %135 = vmatpush1.xpose.msra.mxu0 %v132
    %136 = vmatprep.subr.mxu0 0.0
    %137 = vmatpush1.xpose.msra.mxu0 0.0
    %138 = vmatprep.subr.mxu0 0.0
    %139 = vmatpush1.xpose.msra.mxu0 0.0
    %140 = vmatprep.subr.mxu0 0.0
    %141 = vmatpush1.xpose.msra.mxu0 0.0
    %142 = vmatprep.subr.mxu0 0.0
    %143 = vmatpush1.xpose.msra.mxu0 0.0
    %144 = vmatprep.subr.mxu0 0.0
    %145 = vmatpush1.xpose.msra.mxu0 0.0
    %146 = vmatprep.subr.mxu0 0.0
    %147 = vmatpush1.xpose.msra.mxu0 0.0
    %148 = vmatprep.subr.mxu0 0.0
    %149 = vmatpush1.xpose.msra.mxu0 0.0
    %150 = vmatprep.subr.mxu0 0.0
    %151 = vmatpush1.xpose.msra.mxu0 0.0
    %152 = vmatprep.subr.mxu0 0.0
    %153 = vmatpush1.xpose.msra.mxu0 0.0
    %154 = vmatprep.subr.mxu0 0.0
    %155 = vmatpush1.xpose.msra.mxu0 0.0
    %156 = vmatprep.subr.mxu0 0.0
    %157 = vmatpush1.xpose.msra.mxu0 0.0
    %158 = vmatprep.subr.mxu0 0.0
    %159 = vmatpush1.xpose.msra.mxu0 0.0
    %160 = vmatprep.subr.mxu0 0.0
    %161 = vmatpush1.xpose.msra.mxu0 0.0
    %162 = vmatprep.subr.mxu0 0.0
    %163 = vmatpush1.xpose.msra.mxu0 0.0
    %164 = vmatprep.subr.mxu0 0.0
    %165 = vmatpush1.xpose.msra.mxu0 0.0
    %166 = vmatprep.subr.mxu0 0.0
    %167 = vmatpush1.xpose.msra.mxu0 0.0
    %168 = vmatprep.subr.mxu0 0.0
    %169 = vmatpush1.xpose.msra.mxu0 0.0
    %170 = vmatprep.subr.mxu0 0.0
    %171 = vmatpush1.xpose.msra.mxu0 0.0
    %172 = vmatprep.subr.mxu0 0.0
    %173 = vmatpush1.xpose.msra.mxu0 0.0
    %174 = vmatprep.subr.mxu0 0.0
    %175 = vmatpush1.xpose.msra.mxu0 0.0
    %176 = vmatprep.subr.mxu0 0.0
    %177 = vmatpush1.xpose.msra.mxu0 0.0
    %178 = vmatprep.subr.mxu0 0.0
    %179 = vmatpush1.xpose.msra.mxu0 0.0
    %180 = vmatprep.subr.mxu0 0.0
    %181 = vmatpush1.xpose.msra.mxu0 0.0
    %182 = vmatprep.subr.mxu0 0.0
    %183 = vmatpush1.xpose.msra.mxu0 0.0
    %184 = vmatprep.subr.mxu0 0.0
    %185 = vmatpush1.xpose.msra.mxu0 0.0
    %186 = vmatprep.subr.mxu0 0.0
    %187 = vmatpush1.xpose.msra.mxu0 0.0
    %188 = vmatprep.subr.mxu0 0.0
    %189 = vmatpush1.xpose.msra.mxu0 0.0
    %190 = vmatprep.subr.mxu0 0.0
    %191 = vmatpush1.xpose.msra.mxu0 0.0
    %192 = vmatprep.subr.mxu0 0.0
    %193 = vmatpush1.xpose.msra.mxu0 0.0
    %194 = vmatprep.subr.mxu0 0.0
    %195 = vmatpush1.xpose.msra.mxu0 0.0
    %196 = vmatprep.subr.mxu0 0.0
    %197 = vmatpush1.xpose.msra.mxu0 0.0
    %198 = vmatprep.mubr.f32.mxu0 0.0
    %199 = vmatmul.mubr.f32.gmra.mrb[0].mxu0 %v126
    %v200 = vpop.f32.mrb[0].mxu0
    %v201 = vadd.f32 0.0, %v200
    %v202 = vpop.f32.mrb[0].mxu0
    %203 = vmatprep.mubr.f32.mxu0 0.0
    %204 = vmatmul.mubr.f32.gmra.mrb[0].mxu0 %v129
    %v205 = vpop.f32.mrb[0].mxu0
    %v206 = vadd.f32 0.0, %v205
    %v207 = vpop.f32.mrb[0].mxu0
    %208 = vdwg.mxu0
    %s209 = sld [smem:[#allocation2]]
    %v210 = vlaneseq
    %v211 = vand.u32 %v210, 127
    %vm212 = vcmp.eq.s32.totalorder %v211, 0
    %v213 = vstv %s209
    %v214 = vadd.f32 %v201, %v213
    %v215 = vadd.f32 %v206, %v213
    %v216 = vsel %vm212, %v214, 1.0
    %v217 = vsel %vm212, %v215, 1.0
    %v218 = vsel %vm212, 1.0, %v201
    %v219 = vsel %vm212, 1.0, %v206
    %vm220 = vcmask 15360
    %v222 = vsel %vm220, %v216, 0
    %v225 = vsel %vm220, %v217, 0
    %v228 = vsel %vm220, %v218, 0
    %v231 = vsel %vm220, %v219, 0
    %233 = vmatprep.subr.mxu0 0.0
    %234 = vmatpush1.xpose.msra.mxu0 %v228
    %235 = vmatprep.subr.mxu0 0.0
    %236 = vmatpush1.xpose.msra.mxu0 %v231
    %237 = vmatprep.subr.mxu0 0.0
    %238 = vmatpush1.xpose.msra.mxu0 0.0
    %239 = vmatprep.subr.mxu0 0.0
    %240 = vmatpush1.xpose.msra.mxu0 0.0
    %241 = vmatprep.subr.mxu0 0.0
    %242 = vmatpush1.xpose.msra.mxu0 0.0
    %243 = vmatprep.subr.mxu0 0.0
    %244 = vmatpush1.xpose.msra.mxu0 0.0
    %245 = vmatprep.subr.mxu0 0.0
    %246 = vmatpush1.xpose.msra.mxu0 0.0
    %247 = vmatprep.subr.mxu0 0.0
    %248 = vmatpush1.xpose.msra.mxu0 0.0
    %249 = vmatprep.subr.mxu0 0.0
    %250 = vmatpush1.xpose.msra.mxu0 0.0
    %251 = vmatprep.subr.mxu0 0.0
    %252 = vmatpush1.xpose.msra.mxu0 0.0
    %253 = vmatprep.subr.mxu0 0.0
    %254 = vmatpush1.xpose.msra.mxu0 0.0
    %255 = vmatprep.subr.mxu0 0.0
    %256 = vmatpush1.xpose.msra.mxu0 0.0
    %257 = vmatprep.subr.mxu0 0.0
    %258 = vmatpush1.xpose.msra.mxu0 0.0
    %259 = vmatprep.subr.mxu0 0.0
    %260 = vmatpush1.xpose.msra.mxu0 0.0
    %261 = vmatprep.subr.mxu0 0.0
    %262 = vmatpush1.xpose.msra.mxu0 0.0
    %263 = vmatprep.subr.mxu0 0.0
    %264 = vmatpush1.xpose.msra.mxu0 0.0
    %265 = vmatprep.subr.mxu0 0.0
    %266 = vmatpush1.xpose.msra.mxu0 0.0
    %267 = vmatprep.subr.mxu0 0.0
    %268 = vmatpush1.xpose.msra.mxu0 0.0
    %269 = vmatprep.subr.mxu0 0.0
    %270 = vmatpush1.xpose.msra.mxu0 0.0
    %271 = vmatprep.subr.mxu0 0.0
    %272 = vmatpush1.xpose.msra.mxu0 0.0
    %273 = vmatprep.subr.mxu0 0.0
    %274 = vmatpush1.xpose.msra.mxu0 0.0
    %275 = vmatprep.subr.mxu0 0.0
    %276 = vmatpush1.xpose.msra.mxu0 0.0
    %277 = vmatprep.subr.mxu0 0.0
    %278 = vmatpush1.xpose.msra.mxu0 0.0
    %279 = vmatprep.subr.mxu0 0.0
    %280 = vmatpush1.xpose.msra.mxu0 0.0
    %281 = vmatprep.subr.mxu0 0.0
    %282 = vmatpush1.xpose.msra.mxu0 0.0
    %283 = vmatprep.subr.mxu0 0.0
    %284 = vmatpush1.xpose.msra.mxu0 0.0
    %285 = vmatprep.subr.mxu0 0.0
    %286 = vmatpush1.xpose.msra.mxu0 0.0
    %287 = vmatprep.subr.mxu0 0.0
    %288 = vmatpush1.xpose.msra.mxu0 0.0
    %289 = vmatprep.subr.mxu0 0.0
    %290 = vmatpush1.xpose.msra.mxu0 0.0
    %291 = vmatprep.subr.mxu0 0.0
    %292 = vmatpush1.xpose.msra.mxu0 0.0
    %293 = vmatprep.subr.mxu0 0.0
    %294 = vmatpush1.xpose.msra.mxu0 0.0
    %295 = vmatprep.subr.mxu0 0.0
    %296 = vmatpush1.xpose.msra.mxu0 0.0
    %297 = vmatprep.mubr.f32.mxu0 0.0
    %298 = vmatmul.mubr.f32.gmra.mrb[0].mxu0 %v222
    %v299 = vpop.f32.mrb[0].mxu0
    %v300 = vadd.f32 0.0, %v299
    %v301 = vpop.f32.mrb[0].mxu0
    %302 = vmatprep.mubr.f32.mxu0 0.0
    %303 = vmatmul.mubr.f32.gmra.mrb[0].mxu0 %v225
    %v304 = vpop.f32.mrb[0].mxu0
    %v305 = vadd.f32 0.0, %v304
    %v306 = vpop.f32.mrb[0].mxu0
    %307 = vdwg.mxu0
    %vm308 = vcmp.gt.f32.partialorder %v300, 0.0
    %vm309 = vcmp.gt.f32.partialorder %v305, 0.0
    %v310 = vmul.f32 %v300, 0.2
    %v311 = vmul.f32 %v305, 0.2
    %v312 = vsel %vm308, %v300, %v310
    %v313 = vsel %vm309, %v305, %v311
    %v314 = vmul.f32 %v312, 1.442695
    %v315 = vpow.pop %v314
    %v316 = vmul.f32 %v313, 1.442695
    %v317 = vpow.pop %v316
    %v318 = vld [vmem:[%s1] sm:$0x3]
    %v319 = vlaneseq
    %v320 = vshrl.u32 %v319, 7
    %v321 = vadd.s32 %v320, 8
    %v322 = vlaneseq
    %v323 = vshrl.u32 %v322, 7
    %v324 = vsub.s32 0, %v323
    %v325 = vrot.slane %v318, %v324
    %vm326 = vcmp.eq.s32.totalorder %v325, %v320
    %vm327 = vcmp.eq.s32.totalorder %v325, %v321
    %v328 = vsel %vm326, 1, 0
    %v329 = vsel %vm327, 1, 0
    %v330 = vcvt.s32.f32 %v328
    %v331 = vcvt.s32.f32 %v329
    %v332 = vpack.c.bf16 %v331, %v330
    %v333 = vlaneseq
    %v334 = vshrl.u32 %v333, 7
    %v335 = vsub.s32 1, %v334
    %v336 = vrot.slane %v318, %v335
    %vm337 = vcmp.eq.s32.totalorder %v336, %v320
    %vm338 = vcmp.eq.s32.totalorder %v336, %v321
    %v339 = vsel %vm337, 1, 0
    %v340 = vsel %vm338, 1, 0
    %v341 = vcvt.s32.f32 %v339
    %v342 = vcvt.s32.f32 %v340
    %v343 = vpack.c.bf16 %v342, %v341
    %vm344 = vcmask 523264
    %v346 = vsel %vm344, %v332, 0
    %v349 = vsel %vm344, %v343, 0
    %351 = vmatprep.subr.bf16.mxu0 0
    %352 = vmatpush1.bf16.xpose.msra.mxu0 %v349
    %353 = vmatprep.subr.bf16.mxu0 0
    %354 = vmatpush1.bf16.xpose.msra.mxu0 0
    %355 = vmatprep.subr.bf16.mxu0 0
    %356 = vmatpush1.bf16.xpose.msra.mxu0 0
    %357 = vmatprep.subr.bf16.mxu0 0
    %358 = vmatpush1.bf16.xpose.msra.mxu0 0
    %359 = vmatprep.subr.bf16.mxu0 0
    %360 = vmatpush1.bf16.xpose.msra.mxu0 0
    %361 = vmatprep.subr.bf16.mxu0 0
    %362 = vmatpush1.bf16.xpose.msra.mxu0 0
    %363 = vmatprep.subr.bf16.mxu0 0
    %364 = vmatpush1.bf16.xpose.msra.mxu0 0
    %365 = vmatprep.subr.bf16.mxu0 0
    %366 = vmatpush1.bf16.xpose.msra.mxu0 0
    %367 = vmatprep.subr.bf16.mxu0 0
    %368 = vmatpush1.bf16.xpose.msra.mxu0 0
    %369 = vmatprep.subr.bf16.mxu0 0
    %370 = vmatpush1.bf16.xpose.msra.mxu0 0
    %371 = vmatprep.subr.bf16.mxu0 0
    %372 = vmatpush1.bf16.xpose.msra.mxu0 0
    %373 = vmatprep.subr.bf16.mxu0 0
    %374 = vmatpush1.bf16.xpose.msra.mxu0 0
    %375 = vmatprep.subr.bf16.mxu0 0
    %376 = vmatpush1.bf16.xpose.msra.mxu0 0
    %377 = vmatprep.subr.bf16.mxu0 0
    %378 = vmatpush1.bf16.xpose.msra.mxu0 0
    %379 = vmatprep.subr.bf16.mxu0 0
    %380 = vmatpush1.bf16.xpose.msra.mxu0 0
    %381 = vmatprep.subr.bf16.mxu0 0
    %382 = vmatpush1.bf16.xpose.msra.mxu0 0
    %383 = vmatprep.mubr.bf16.mxu0 0
    %384 = vmatmul.mubr.bf16.gmra.mrb[0].mxu0 %v346
    %v385 = vpop.f32.mrb[0].mxu0
    %v386 = vadd.f32 0.0, %v385
    %v387 = vpop.f32.mrb[0].mxu0
    %v388 = vpop.f32.mrb[0].mxu0
    %v389 = vadd.f32 0.0, %v388
    %v390 = vpop.f32.mrb[0].mxu0
    %391 = vdwg.mxu0
    %vm392 = vcmp.gt.f32.partialorder %v386, 0.0
    %vm393 = vcmp.gt.f32.partialorder %v389, 0.0
    %v394 = vmul.f32 %v386, %v315
    %v395 = vmul.f32 %v389, %v317
    %v396 = vsel %vm392, %v394, 0.0
    %v397 = vsel %vm393, %v395, 0.0
    %vm398 = vcmask 130048
    %v400 = vsel %vm398, %v396, 0
    %v403 = vsel %vm398, %v397, 0
    %405 = vmatprep.subr.mxu0 0.0
    %406 = vmatpush1.msra.mxu0 %v20
    %407 = vmatprep.subr.mxu0 0.0
    %408 = vmatpush1.msra.mxu0 %v21
    %409 = vmatprep.subr.mxu0 0.0
    %410 = vmatpush1.msra.mxu0 0.0
    %411 = vmatprep.subr.mxu0 0.0
    %412 = vmatpush1.msra.mxu0 0.0
    %413 = vmatprep.subr.mxu0 0.0
    %414 = vmatpush1.msra.mxu0 0.0
    %415 = vmatprep.subr.mxu0 0.0
    %416 = vmatpush1.msra.mxu0 0.0
    %417 = vmatprep.subr.mxu0 0.0
    %418 = vmatpush1.msra.mxu0 0.0
    %419 = vmatprep.subr.mxu0 0.0
    %420 = vmatpush1.msra.mxu0 0.0
    %421 = vmatprep.subr.mxu0 0.0
    %422 = vmatpush1.msra.mxu0 0.0
    %423 = vmatprep.subr.mxu0 0.0
    %424 = vmatpush1.msra.mxu0 0.0
    %425 = vmatprep.subr.mxu0 0.0
    %426 = vmatpush1.msra.mxu0 0.0
    %427 = vmatprep.subr.mxu0 0.0
    %428 = vmatpush1.msra.mxu0 0.0
    %429 = vmatprep.subr.mxu0 0.0
    %430 = vmatpush1.msra.mxu0 0.0
    %431 = vmatprep.subr.mxu0 0.0
    %432 = vmatpush1.msra.mxu0 0.0
    %433 = vmatprep.subr.mxu0 0.0
    %434 = vmatpush1.msra.mxu0 0.0
    %435 = vmatprep.subr.mxu0 0.0
    %436 = vmatpush1.msra.mxu0 0.0
    %437 = vmatprep.subr.mxu0 0.0
    %438 = vmatpush1.msra.mxu0 0.0
    %439 = vmatprep.subr.mxu0 0.0
    %440 = vmatpush1.msra.mxu0 0.0
    %441 = vmatprep.subr.mxu0 0.0
    %442 = vmatpush1.msra.mxu0 0.0
    %443 = vmatprep.subr.mxu0 0.0
    %444 = vmatpush1.msra.mxu0 0.0
    %445 = vmatprep.subr.mxu0 0.0
    %446 = vmatpush1.msra.mxu0 0.0
    %447 = vmatprep.subr.mxu0 0.0
    %448 = vmatpush1.msra.mxu0 0.0
    %449 = vmatprep.subr.mxu0 0.0
    %450 = vmatpush1.msra.mxu0 0.0
    %451 = vmatprep.subr.mxu0 0.0
    %452 = vmatpush1.msra.mxu0 0.0
    %453 = vmatprep.subr.mxu0 0.0
    %454 = vmatpush1.msra.mxu0 0.0
    %455 = vmatprep.subr.mxu0 0.0
    %456 = vmatpush1.msra.mxu0 0.0
    %457 = vmatprep.subr.mxu0 0.0
    %458 = vmatpush1.msra.mxu0 0.0
    %459 = vmatprep.subr.mxu0 0.0
    %460 = vmatpush1.msra.mxu0 0.0
    %461 = vmatprep.subr.mxu0 0.0
    %462 = vmatpush1.msra.mxu0 0.0
    %463 = vmatprep.subr.mxu0 0.0
    %464 = vmatpush1.msra.mxu0 0.0
    %465 = vmatprep.subr.mxu0 0.0
    %466 = vmatpush1.msra.mxu0 0.0
    %467 = vmatprep.subr.mxu0 0.0
    %468 = vmatpush1.msra.mxu0 0.0
    %469 = vmatprep.mubr.f32.mxu0 0.0
    %470 = vmatmul.mubr.f32.gmra.mrb[0].mxu0 %v400
    %v471 = vpop.f32.mrb[0].mxu0
    %v472 = vadd.f32 0.0, %v471
    %v473 = vpop.f32.mrb[0].mxu0
    %474 = vmatprep.mubr.f32.mxu0 0.0
    %475 = vmatmul.mubr.f32.gmra.mrb[0].mxu0 %v403
    %v476 = vpop.f32.mrb[0].mxu0
    %v477 = vadd.f32 0.0, %v476
    %v478 = vpop.f32.mrb[0].mxu0
    %479 = vdwg.mxu0
    %v480 = vadd.f32 %v472, 1e-20
    %v481 = vadd.f32 %v477, 1e-20
    %483 = vset.pattern.permute.xlu0 32
    %484 = vperm.xlu0 %483, %v480
    %v485 = vpop.permute.xlu0 %484
    %488 = vset.pattern.permute.xlu0 32
    %489 = vperm.xlu0 %488, %v481
    %v490 = vpop.permute.xlu0 %489
    %v492 = vrcp.pop %v485
    %v493 = vmul.f32 %v472, %v492
    %v494 = vrcp.pop %v490
    %v495 = vmul.f32 %v477, %v494
    %v497 = vsel %vm43, %v493, 0
    %v500 = vsel %vm43, %v495, 0
    %502 = vmatprep.subr.mxu0 0.0
    %503 = vmatpush1.msra.mxu0 %v30
    %504 = vmatprep.subr.mxu0 0.0
    %505 = vmatpush1.msra.mxu0 %v31
    %506 = vmatprep.subr.mxu0 0.0
    %507 = vmatpush1.msra.mxu0 %v32
    %508 = vmatprep.subr.mxu0 0.0
    %509 = vmatpush1.msra.mxu0 %v33
    %510 = vmatprep.subr.mxu0 0.0
    %511 = vmatpush1.msra.mxu0 0.0
    %512 = vmatprep.subr.mxu0 0.0
    %513 = vmatpush1.msra.mxu0 0.0
    %514 = vmatprep.subr.mxu0 0.0
    %515 = vmatpush1.msra.mxu0 0.0
    %516 = vmatprep.subr.mxu0 0.0
    %517 = vmatpush1.msra.mxu0 0.0
    %518 = vmatprep.subr.mxu0 0.0
    %519 = vmatpush1.msra.mxu0 0.0
    %520 = vmatprep.subr.mxu0 0.0
    %521 = vmatpush1.msra.mxu0 0.0
    %522 = vmatprep.subr.mxu0 0.0
    %523 = vmatpush1.msra.mxu0 0.0
    %524 = vmatprep.subr.mxu0 0.0
    %525 = vmatpush1.msra.mxu0 0.0
    %526 = vmatprep.subr.mxu0 0.0
    %527 = vmatpush1.msra.mxu0 0.0
    %528 = vmatprep.subr.mxu0 0.0
    %529 = vmatpush1.msra.mxu0 0.0
    %530 = vmatprep.subr.mxu0 0.0
    %531 = vmatpush1.msra.mxu0 0.0
    %532 = vmatprep.subr.mxu0 0.0
    %533 = vmatpush1.msra.mxu0 0.0
    %534 = vmatprep.subr.mxu0 0.0
    %535 = vmatpush1.msra.mxu0 0.0
    %536 = vmatprep.subr.mxu0 0.0
    %537 = vmatpush1.msra.mxu0 0.0
    %538 = vmatprep.subr.mxu0 0.0
    %539 = vmatpush1.msra.mxu0 0.0
    %540 = vmatprep.subr.mxu0 0.0
    %541 = vmatpush1.msra.mxu0 0.0
    %542 = vmatprep.subr.mxu0 0.0
    %543 = vmatpush1.msra.mxu0 0.0
    %544 = vmatprep.subr.mxu0 0.0
    %545 = vmatpush1.msra.mxu0 0.0
    %546 = vmatprep.subr.mxu0 0.0
    %547 = vmatpush1.msra.mxu0 0.0
    %548 = vmatprep.subr.mxu0 0.0
    %549 = vmatpush1.msra.mxu0 0.0
    %550 = vmatprep.subr.mxu0 0.0
    %551 = vmatpush1.msra.mxu0 0.0
    %552 = vmatprep.subr.mxu0 0.0
    %553 = vmatpush1.msra.mxu0 0.0
    %554 = vmatprep.subr.mxu0 0.0
    %555 = vmatpush1.msra.mxu0 0.0
    %556 = vmatprep.subr.mxu0 0.0
    %557 = vmatpush1.msra.mxu0 0.0
    %558 = vmatprep.subr.mxu0 0.0
    %559 = vmatpush1.msra.mxu0 0.0
    %560 = vmatprep.subr.mxu0 0.0
    %561 = vmatpush1.msra.mxu0 0.0
    %562 = vmatprep.subr.mxu0 0.0
    %563 = vmatpush1.msra.mxu0 0.0
    %564 = vmatprep.subr.mxu0 0.0
    %565 = vmatpush1.msra.mxu0 0.0
    %566 = vmatprep.mubr.f32.mxu0 0.0
    %567 = vmatmul.mubr.f32.gmra.mrb[0].mxu0 %v497
    %v568 = vpop.f32.mrb[0].mxu0
    %v569 = vadd.f32 0.0, %v568
    %v570 = vpop.f32.mrb[0].mxu0
    %571 = vmatprep.mubr.f32.mxu0 0.0
    %572 = vmatmul.mubr.f32.gmra.mrb[0].mxu0 %v500
    %v573 = vpop.f32.mrb[0].mxu0
    %v574 = vadd.f32 0.0, %v573
    %v575 = vpop.f32.mrb[0].mxu0
    %576 = vdwg.mxu0
    %577 = vmatprep.subr.mxu0 0.0
    %578 = vmatpush1.msra.mxu0 %v26
    %579 = vmatprep.subr.mxu0 0.0
    %580 = vmatpush1.msra.mxu0 %v27
    %581 = vmatprep.subr.mxu0 0.0
    %582 = vmatpush1.msra.mxu0 %v28
    %583 = vmatprep.subr.mxu0 0.0
    %584 = vmatpush1.msra.mxu0 %v29
    %585 = vmatprep.subr.mxu0 0.0
    %586 = vmatpush1.msra.mxu0 0.0
    %587 = vmatprep.subr.mxu0 0.0
    %588 = vmatpush1.msra.mxu0 0.0
    %589 = vmatprep.subr.mxu0 0.0
    %590 = vmatpush1.msra.mxu0 0.0
    %591 = vmatprep.subr.mxu0 0.0
    %592 = vmatpush1.msra.mxu0 0.0
    %593 = vmatprep.subr.mxu0 0.0
    %594 = vmatpush1.msra.mxu0 0.0
    %595 = vmatprep.subr.mxu0 0.0
    %596 = vmatpush1.msra.mxu0 0.0
    %597 = vmatprep.subr.mxu0 0.0
    %598 = vmatpush1.msra.mxu0 0.0
    %599 = vmatprep.subr.mxu0 0.0
    %600 = vmatpush1.msra.mxu0 0.0
    %601 = vmatprep.subr.mxu0 0.0
    %602 = vmatpush1.msra.mxu0 0.0
    %603 = vmatprep.subr.mxu0 0.0
    %604 = vmatpush1.msra.mxu0 0.0
    %605 = vmatprep.subr.mxu0 0.0
    %606 = vmatpush1.msra.mxu0 0.0
    %607 = vmatprep.subr.mxu0 0.0
    %608 = vmatpush1.msra.mxu0 0.0
    %609 = vmatprep.subr.mxu0 0.0
    %610 = vmatpush1.msra.mxu0 0.0
    %611 = vmatprep.subr.mxu0 0.0
    %612 = vmatpush1.msra.mxu0 0.0
    %613 = vmatprep.subr.mxu0 0.0
    %614 = vmatpush1.msra.mxu0 0.0
    %615 = vmatprep.subr.mxu0 0.0
    %616 = vmatpush1.msra.mxu0 0.0
    %617 = vmatprep.subr.mxu0 0.0
    %618 = vmatpush1.msra.mxu0 0.0
    %619 = vmatprep.subr.mxu0 0.0
    %620 = vmatpush1.msra.mxu0 0.0
    %621 = vmatprep.subr.mxu0 0.0
    %622 = vmatpush1.msra.mxu0 0.0
    %623 = vmatprep.subr.mxu0 0.0
    %624 = vmatpush1.msra.mxu0 0.0
    %625 = vmatprep.subr.mxu0 0.0
    %626 = vmatpush1.msra.mxu0 0.0
    %627 = vmatprep.subr.mxu0 0.0
    %628 = vmatpush1.msra.mxu0 0.0
    %629 = vmatprep.subr.mxu0 0.0
    %630 = vmatpush1.msra.mxu0 0.0
    %631 = vmatprep.subr.mxu0 0.0
    %632 = vmatpush1.msra.mxu0 0.0
    %633 = vmatprep.subr.mxu0 0.0
    %634 = vmatpush1.msra.mxu0 0.0
    %635 = vmatprep.subr.mxu0 0.0
    %636 = vmatpush1.msra.mxu0 0.0
    %637 = vmatprep.subr.mxu0 0.0
    %638 = vmatpush1.msra.mxu0 0.0
    %639 = vmatprep.subr.mxu0 0.0
    %640 = vmatpush1.msra.mxu0 0.0
    %641 = vmatprep.mubr.f32.mxu0 0.0
    %642 = vmatmul.mubr.f32.gmra.mrb[0].mxu0 %v45
    %v643 = vpop.f32.mrb[0].mxu0
    %v644 = vadd.f32 %v569, %v643
    %v645 = vpop.f32.mrb[0].mxu0
    %646 = vmatprep.mubr.f32.mxu0 0.0
    %647 = vmatmul.mubr.f32.gmra.mrb[0].mxu0 %v48
    %v648 = vpop.f32.mrb[0].mxu0
    %v649 = vadd.f32 %v574, %v648
    %v650 = vpop.f32.mrb[0].mxu0
    %651 = vdwg.mxu0
    %v652 = vlaneseq
    %v653 = vshrl.u32 %v652, 7
    %v654 = vsub.s32 0, %v653
    %v655 = vrot.slane %v36, %v654
    %v656 = vadd.f32 %v644, %v655
    %v657 = vadd.f32 %v649, %v655
    %v658 = vsel %vm43, %v656, 0.0
    %659 = vadd.xlane.f32.xlu0 %v658
    %v660 = vpop.xlane.xlu0 %659
    %v661 = vsel %vm43, %v657, 0.0
    %662 = vadd.xlane.f32.xlu0 %v661
    %v663 = vpop.xlane.xlu0 %662
    %v664 = vrcp.pop 32.0
    %v665 = vmul.f32 %v660, %v664
    %v666 = vmul.f32 %v663, %v664
    %v667 = vsub.f32 %v656, %v665
    %v668 = vsub.f32 %v657, %v666
    %v669 = vmul.f32 %v667, %v667
    %v670 = vmul.f32 %v668, %v668
    %v671 = vsel %vm43, %v669, 0.0
    %672 = vadd.xlane.f32.xlu0 %v671
    %v673 = vpop.xlane.xlu0 %672
    %v674 = vsel %vm43, %v670, 0.0
    %675 = vadd.xlane.f32.xlu0 %v674
    %v676 = vpop.xlane.xlu0 %675
    %v677 = vmul.f32 %v673, %v664
    %v678 = vmul.f32 %v676, %v664
    %v679 = vadd.f32 %v677, 1e-05
    %v680 = vadd.f32 %v678, 1e-05
    %v681 = vrsqrt.pop %v679
    %v682 = vrsqrt.pop %v680
    %v683 = vmul.f32 %v667, %v681
    %v684 = vmul.f32 %v668, %v682
    %v685 = vlaneseq
    %v686 = vshrl.u32 %v685, 7
    %v687 = vsub.s32 0, %v686
    %v688 = vrot.slane %v37, %v687
    %v689 = vmul.f32 %v683, %v688
    %v690 = vmul.f32 %v684, %v688
    %v691 = vlaneseq
    %v692 = vshrl.u32 %v691, 7
    %v693 = vsub.s32 0, %v692
    %v694 = vrot.slane %v38, %v693
    %v695 = vadd.f32 %v689, %v694
    %v696 = vadd.f32 %v690, %v694
    %697 = vst.msk [vmem:[#allocation3] sm:$0xff] %vm43, %v695
    %698 = vst.msk [vmem:[#allocation3 + $0x8] sm:$0xff] %vm43, %v696
    // Predicated region
    $region18: #{tpu_custom_call.1} parent=1 // pred_check
      _
    $region19: #{tpu_custom_call.1} parent=1 // pred_check_branch
      %700 = sbr.rel (0) target = $region21
    $region20: #{tpu_custom_call.1} parent=1 // pred_region
      %s702 = ssub.s32 256, 256
      %703 = vsyncadd [#allocation4], %s702
      %s704 = sshll.u32 [#allocation3], 4
      %s705 = int_to_ptr.vmem [resolvable:$true] %s704
      %710 = dma.vmem_to_hbm [thread:$0]  %s705, 256, %s4, [#allocation4], 128, 128, 8
    $region21: #{tpu_custom_call.1} parent=1 // pred_fallthru
      _
    // Predicated region
    $region22: #{tpu_custom_call.1} parent=1 // pred_check
      _
    $region23: #{tpu_custom_call.1} parent=1 // pred_check_branch
      %712 = sbr.rel (0) target = $region25
    $region24: #{tpu_custom_call.1} parent=1 // pred_region
      %713 = dma.done [#allocation4], 256
    $region25: #{tpu_custom_call.1} parent=1 // pred_fallthru
      _
    %714 = vsyncpa [#allocation4], 1

</llo_original>
